<compile_context>
chip_gen: v6e
topology: v6e:2x2x1
jax: 0.10.0
libtpu: 0.0.40
codegen_flags: <defaults>
</compile_context>

<pallas_src>
import jax
import jax.numpy as jnp
from jax.experimental import pallas as pl
from jax.experimental.pallas import tpu as pltpu

N_EMBD = 32
HIDDEN = 4 * N_EMBD
LEAKY_SLOPE = 0.01           # PyTorch nn.LeakyReLU default negative_slope
TILE_N_MAX = 1024            # token-tile width on the lane axis (multiple of 128)


def _round_up(n, m):
    return (n + m - 1) // m * m


def _ffwd_kernel(xT_ref, w1T_ref, b1_ref, w2T_ref, oT_ref):
    # xT_ref : (C, TILE_N)   tokens on the lane axis
    # w1T_ref: (4C, C)       b1_ref: (4C, 1)       w2T_ref: (C, 4C)
    xT = xT_ref[...]
    w1T = w1T_ref[...]
    w2T = w2T_ref[...]

    # Linear 1 (with bias) on the MXU, f32 accumulation:  h^T = W1^T @ x^T + b1
    hT = jnp.dot(w1T, xT, preferred_element_type=jnp.float32)
    hT = hT + b1_ref[...].astype(jnp.float32)
    # LeakyReLU in f32 on the VPU (safe on v5e, which has no bf16 VPU).
    hT = jnp.where(hT >= 0, hT, LEAKY_SLOPE * hT)
    # Dropout(p=0.0) == identity
    # Linear 2 (no bias):  y^T = W2^T @ h^T  (MXU operands in native dtype)
    yT = jnp.dot(w2T, hT.astype(w2T.dtype), preferred_element_type=jnp.float32)

    oT_ref[...] = yT.astype(oT_ref.dtype)


@jax.jit
def feed_forward(x, w1, b1, w2):
    """x: (B, T, C) with C == n_embd. Returns (B, T, C)."""
    B, T, C = x.shape
    assert C == N_EMBD
    N = B * T

    tile_n = min(TILE_N_MAX, _round_up(N, 128))
    Np = _round_up(N, tile_n)
    n_tiles = Np // tile_n

    # Layout plumbing (outside the kernel): pad tokens to a tile multiple and
    # transpose so tokens are on the lane (last) axis -> lane-dense DMA/stores.
    x2d = x.reshape(N, C)
    if Np != N:
        x2d = jnp.pad(x2d, ((0, Np - N), (0, 0)))
    xT = x2d.T                       # (C, Np)
    w1T = w1.T                       # (4C, C)
    w2T = w2.T                       # (C, 4C)
    b1c = b1.reshape(HIDDEN, 1)      # (4C, 1)

    bytes_el = x.dtype.itemsize
    cost = pl.CostEstimate(
        flops=4 * N * C * HIDDEN,    # two matmuls: 2*N*C*4C each
        transcendentals=0,
        bytes_accessed=(2 * N * C) * bytes_el
        + (C * HIDDEN + HIDDEN * C + HIDDEN) * w1.dtype.itemsize,
    )

    oT = pl.pallas_call(
        _ffwd_kernel,
        out_shape=jax.ShapeDtypeStruct((C, Np), x.dtype),
        grid=(n_tiles,),
        in_specs=[
            pl.BlockSpec((C, tile_n), lambda i: (0, i)),    # x^T tile (pipelined)
            pl.BlockSpec((HIDDEN, C), lambda i: (0, 0)),    # W1^T (VMEM-resident)
            pl.BlockSpec((HIDDEN, 1), lambda i: (0, 0)),    # b1   (VMEM-resident)
            pl.BlockSpec((C, HIDDEN), lambda i: (0, 0)),    # W2^T (VMEM-resident)
        ],
        out_specs=pl.BlockSpec((C, tile_n), lambda i: (0, i)),
        compiler_params=pltpu.CompilerParams(
            dimension_semantics=("parallel",),              # shard tiles on v7x's 2 TCs
            vmem_limit_bytes=32 * 1024 * 1024,              # explicit, safe on v5e/v6e/v7x
        ),
        cost_estimate=cost,
    )(xT, w1T, b1c, w2T)

    return oT.T[:N].reshape(B, T, C)


def _ref_forward(x, w1, b1, w2):
    h = jnp.dot(x, w1) + b1
    h = jnp.where(h >= 0, h, LEAKY_SLOPE * h)
    return jnp.dot(h, w2)


if __name__ == "__main__":
    key = jax.random.PRNGKey(0)
    k_x, k_w1, k_b1, k_w2 = jax.random.split(key, 4)

    B, T = 2, 8
    x = jax.random.normal(k_x, (B, T, N_EMBD), dtype=jnp.float32)

    # Deterministic param init (uniform in +-1/sqrt(fan_in), like nn.Linear).
    lim1 = 1.0 / jnp.sqrt(jnp.float32(N_EMBD))
    lim2 = 1.0 / jnp.sqrt(jnp.float32(HIDDEN))
    w1 = jax.random.uniform(k_w1, (N_EMBD, HIDDEN), jnp.float32, -lim1, lim1)
    b1 = jax.random.uniform(k_b1, (HIDDEN,), jnp.float32, -lim1, lim1)
    w2 = jax.random.uniform(k_w2, (HIDDEN, N_EMBD), jnp.float32, -lim2, lim2)

    y = feed_forward(x, w1, b1, w2)
    jax.block_until_ready(y)

    y_ref = _ref_forward(x, w1, b1, w2)
    assert y.shape == (B, T, N_EMBD)
    assert jnp.allclose(y, y_ref, atol=1e-4, rtol=1e-4)

    print("KERNEL_OK")
</pallas_src>

<mosaic_0001>
module attributes {stable_mosaic.version = 11 : i64} {
  func.func @_ffwd_kernel(%arg0: i32, %arg1: memref<32x128xf32, #tpu.memory_space<vmem>>, %arg2: memref<128x32xf32, #tpu.memory_space<vmem>>, %arg3: memref<128x1xf32, #tpu.memory_space<vmem>>, %arg4: memref<32x128xf32, #tpu.memory_space<vmem>>, %arg5: memref<32x128xf32, #tpu.memory_space<vmem>>) attributes {dimension_semantics = [#tpu.dimension_semantics<parallel>], iteration_bounds = array<i64: 1>, scalar_prefetch = 0 : i64, scratch_operands = 0 : i64, tpu.core_type = #tpu.core_type<tc>, window_params = [{transform_indices = @transform_0, window_bounds = array<i64: 32, 128>}, {pipeline_mode = #tpu.pipeline_mode<synchronous>, transform_indices = @transform_1, window_bounds = array<i64: 128, 32>}, {pipeline_mode = #tpu.pipeline_mode<synchronous>, transform_indices = @transform_2, window_bounds = array<i64: 128, 1>}, {pipeline_mode = #tpu.pipeline_mode<synchronous>, transform_indices = @transform_3, window_bounds = array<i64: 32, 128>}, {transform_indices = @transform_4, window_bounds = array<i64: 32, 128>}]} {
    %c0 = arith.constant 0 : index
    %c0_0 = arith.constant 0 : index
    %0 = vector.load %arg1[%c0, %c0_0] : memref<32x128xf32, #tpu.memory_space<vmem>>, vector<32x128xf32>
    %c0_1 = arith.constant 0 : index
    %c0_2 = arith.constant 0 : index
    %1 = vector.load %arg2[%c0_1, %c0_2] : memref<128x32xf32, #tpu.memory_space<vmem>>, vector<128x32xf32>
    %c0_3 = arith.constant 0 : index
    %c0_4 = arith.constant 0 : index
    %2 = vector.load %arg4[%c0_3, %c0_4] : memref<32x128xf32, #tpu.memory_space<vmem>>, vector<32x128xf32>
    %cst = arith.constant dense<0.000000e+00> : vector<128x128xf32>
    %3 = tpu.matmul %1, %0, %cst {dimension_numbers = #tpu.dot_dimension_numbers<[1], [0], [0], [1], [0, 0, 1, 1], [], []>} : vector<128x32xf32>, vector<32x128xf32>, vector<128x128xf32> -> vector<128x128xf32>
    %c0_5 = arith.constant 0 : index
    %c0_6 = arith.constant 0 : index
    %4 = vector.load %arg3[%c0_5, %c0_6] : memref<128x1xf32, #tpu.memory_space<vmem>>, vector<128x1xf32>
    %5 = vector.broadcast %4 : vector<128x1xf32> to vector<128x128xf32>
    %6 = arith.addf %3, %5 : vector<128x128xf32>
    %cst_7 = arith.constant 0.000000e+00 : f32
    %7 = vector.broadcast %cst_7 : f32 to vector<128x128xf32>
    %8 = arith.cmpf oge, %6, %7 : vector<128x128xf32>
    %cst_8 = arith.constant 0.00999999977 : f32
    %9 = vector.broadcast %cst_8 : f32 to vector<128x128xf32>
    %10 = arith.mulf %9, %6 : vector<128x128xf32>
    %11 = arith.select %8, %6, %10 : vector<128x128xi1>, vector<128x128xf32>
    %cst_9 = arith.constant dense<0.000000e+00> : vector<32x128xf32>
    %12 = tpu.matmul %2, %11, %cst_9 {dimension_numbers = #tpu.dot_dimension_numbers<[1], [0], [0], [1], [0, 0, 1, 1], [], []>} : vector<32x128xf32>, vector<128x128xf32>, vector<32x128xf32> -> vector<32x128xf32>
    %c0_10 = arith.constant 0 : index
    %c0_11 = arith.constant 0 : index
    %13 = vector.load %arg5[%c0_10, %c0_11] : memref<32x128xf32, #tpu.memory_space<vmem>>, vector<32x128xf32>
    tpu.vector_store %arg5[%c0_10, %c0_11], %12 {strides = array<i32>} : memref<32x128xf32, #tpu.memory_space<vmem>>, vector<32x128xf32>,
    return
  }
  func.func @transform_0(%arg0: i32) -> (i32, i32) {
    %c0_i32 = arith.constant 0 : i32
    %c0_i32_0 = arith.constant 0 : i32
    return %c0_i32, %arg0 : i32, i32
  }
  func.func @transform_1(%arg0: i32) -> (i32, i32) {
    %c0_i32 = arith.constant 0 : i32
    %c0_i32_0 = arith.constant 0 : i32
    %c0_i32_1 = arith.constant 0 : i32
    return %c0_i32, %c0_i32_0 : i32, i32
  }
  func.func @transform_2(%arg0: i32) -> (i32, i32) {
    %c0_i32 = arith.constant 0 : i32
    %c0_i32_0 = arith.constant 0 : i32
    %c0_i32_1 = arith.constant 0 : i32
    return %c0_i32, %c0_i32_0 : i32, i32
  }
  func.func @transform_3(%arg0: i32) -> (i32, i32) {
    %c0_i32 = arith.constant 0 : i32
    %c0_i32_0 = arith.constant 0 : i32
    %c0_i32_1 = arith.constant 0 : i32
    return %c0_i32, %c0_i32_0 : i32, i32
  }
  func.func @transform_4(%arg0: i32) -> (i32, i32) {
    %c0_i32 = arith.constant 0 : i32
    %c0_i32_0 = arith.constant 0 : i32
    return %c0_i32, %arg0 : i32, i32
  }
}

</mosaic_0001>

<llo_original>
// kernel: feed_forward.1
$region0: #{feed_forward.1}
  #allocation0 [shape = 'u32[]', space=smem, size = 0x4, offset = 0x4, fixed_abs, tag = 'smem constant byte address 0x4 - core index']
  #allocation1 [shape = 'u32[144,128]{1,0:T(1,128)}', space=vmem, size = 0x12000, scoped, tag = 'internal scratch']
  %s0 = inlined_call_operand.vmem [shape: f32[32,128], index: 0, kind: input, shape index: {}]
  %s1 = inlined_call_operand.vmem [shape: f32[128,32], index: 1, kind: input, shape index: {}]
  %s2 = inlined_call_operand.vmem [shape: f32[128,1], index: 2, kind: input, shape index: {}]
  %s3 = inlined_call_operand.vmem [shape: f32[32,128], index: 3, kind: input, shape index: {}]
  %s4 = inlined_call_operand.vmem [shape: f32[32,128], index: 4, kind: output, shape index: {}]
  %s5 = sld [smem:[#allocation0]]
  $region26: #{feed_forward.1} parent=0
    _
  %s7 = ssub.s32 1, %s5
  %s8 = scalar_select 0, %s7, %s5
  // Predicated region
  $region2: #{feed_forward.1} parent=0 // pred_check
    _
  $region3: #{feed_forward.1} parent=0 // pred_check_branch
    %10 = sbr.rel (0) target = $region5
  $region4: #{feed_forward.1} parent=0 // pred_region
    _
  $region5: #{feed_forward.1} parent=0 // pred_fallthru
    _
  // Predicated region
  $region6: #{feed_forward.1} parent=0 // pred_check
    _
  $region7: #{feed_forward.1} parent=0 // pred_check_branch
    %12 = sbr.rel (0) target = $region9
  $region8: #{feed_forward.1} parent=0 // pred_region
    _
  $region9: #{feed_forward.1} parent=0 // pred_fallthru
    _
  // Predicated region
  $region10: #{feed_forward.1} parent=0 // pred_check
    _
  $region11: #{feed_forward.1} parent=0 // pred_check_branch
    %14 = sbr.rel (0) target = $region13
  $region12: #{feed_forward.1} parent=0 // pred_region
    _
  $region13: #{feed_forward.1} parent=0 // pred_fallthru
    _
  // Predicated region
  $region14: #{feed_forward.1} parent=0 // pred_check
    _
  $region15: #{feed_forward.1} parent=0 // pred_check_branch
    %16 = sbr.rel (0) target = $region17
  $region16: #{feed_forward.1} parent=0 // pred_region
    _
  $region17: #{feed_forward.1} parent=0 // pred_fallthru
    _
  %v17 = vld [vmem:[%s0] sm:$0xff]
  %v18 = vld [vmem:[%s0 + $0x8] sm:$0xff]
  %v19 = vld [vmem:[%s0 + $0x10] sm:$0xff]
  %v20 = vld [vmem:[%s0 + $0x18] sm:$0xff]
  %v21 = vld [vmem:[%s1] sm:$0xff]
  %v22 = vld [vmem:[%s1 + $0x8] sm:$0xff]
  %v23 = vld [vmem:[%s1 + $0x10] sm:$0xff]
  %v24 = vld [vmem:[%s1 + $0x18] sm:$0xff]
  %v25 = vld [vmem:[%s1 + $0x20] sm:$0xff]
  %v26 = vld [vmem:[%s1 + $0x28] sm:$0xff]
  %v27 = vld [vmem:[%s1 + $0x30] sm:$0xff]
  %v28 = vld [vmem:[%s1 + $0x38] sm:$0xff]
  %v29 = vld [vmem:[%s1 + $0x40] sm:$0xff]
  %v30 = vld [vmem:[%s1 + $0x48] sm:$0xff]
  %v31 = vld [vmem:[%s1 + $0x50] sm:$0xff]
  %v32 = vld [vmem:[%s1 + $0x58] sm:$0xff]
  %v33 = vld [vmem:[%s1 + $0x60] sm:$0xff]
  %v34 = vld [vmem:[%s1 + $0x68] sm:$0xff]
  %v35 = vld [vmem:[%s1 + $0x70] sm:$0xff]
  %v36 = vld [vmem:[%s1 + $0x78] sm:$0xff]
  %v37 = vld [vmem:[%s3] sm:$0xff]
  %v38 = vld [vmem:[%s3 + $0x8] sm:$0xff]
  %v39 = vld [vmem:[%s3 + $0x10] sm:$0xff]
  %v40 = vld [vmem:[%s3 + $0x18] sm:$0xff]
  %v41 = vld [vmem:[%s2] sm:$0xff]
  %v42 = vld [vmem:[%s2 + $0x8] sm:$0xff]
  %v43 = vld [vmem:[%s2 + $0x10] sm:$0xff]
  %v44 = vld [vmem:[%s2 + $0x18] sm:$0xff]
  %v45 = vld [vmem:[%s2 + $0x20] sm:$0xff]
  %v46 = vld [vmem:[%s2 + $0x28] sm:$0xff]
  %v47 = vld [vmem:[%s2 + $0x30] sm:$0xff]
  %v48 = vld [vmem:[%s2 + $0x38] sm:$0xff]
  %v49 = vld [vmem:[%s2 + $0x40] sm:$0xff]
  %v50 = vld [vmem:[%s2 + $0x48] sm:$0xff]
  %v51 = vld [vmem:[%s2 + $0x50] sm:$0xff]
  %v52 = vld [vmem:[%s2 + $0x58] sm:$0xff]
  %v53 = vld [vmem:[%s2 + $0x60] sm:$0xff]
  %v54 = vld [vmem:[%s2 + $0x68] sm:$0xff]
  %v55 = vld [vmem:[%s2 + $0x70] sm:$0xff]
  %v56 = vld [vmem:[%s2 + $0x78] sm:$0xff]
  %58 = vset.pattern.permute.xlu0 0
  %59 = vperm.xlu0 %58, %v41
  %v60 = vpop.permute.xlu0 %59
  %63 = vset.pattern.permute.xlu0 0
  %64 = vperm.xlu0 %63, %v42
  %v65 = vpop.permute.xlu0 %64
  %68 = vset.pattern.permute.xlu0 0
  %69 = vperm.xlu0 %68, %v43
  %v70 = vpop.permute.xlu0 %69
  %73 = vset.pattern.permute.xlu0 0
  %74 = vperm.xlu0 %73, %v44
  %v75 = vpop.permute.xlu0 %74
  %78 = vset.pattern.permute.xlu0 0
  %79 = vperm.xlu0 %78, %v45
  %v80 = vpop.permute.xlu0 %79
  %83 = vset.pattern.permute.xlu0 0
  %84 = vperm.xlu0 %83, %v46
  %v85 = vpop.permute.xlu0 %84
  %88 = vset.pattern.permute.xlu0 0
  %89 = vperm.xlu0 %88, %v47
  %v90 = vpop.permute.xlu0 %89
  %93 = vset.pattern.permute.xlu0 0
  %94 = vperm.xlu0 %93, %v48
  %v95 = vpop.permute.xlu0 %94
  %98 = vset.pattern.permute.xlu0 0
  %99 = vperm.xlu0 %98, %v49
  %v100 = vpop.permute.xlu0 %99
  %103 = vset.pattern.permute.xlu0 0
  %104 = vperm.xlu0 %103, %v50
  %v105 = vpop.permute.xlu0 %104
  %108 = vset.pattern.permute.xlu0 0
  %109 = vperm.xlu0 %108, %v51
  %v110 = vpop.permute.xlu0 %109
  %113 = vset.pattern.permute.xlu0 0
  %114 = vperm.xlu0 %113, %v52
  %v115 = vpop.permute.xlu0 %114
  %118 = vset.pattern.permute.xlu0 0
  %119 = vperm.xlu0 %118, %v53
  %v120 = vpop.permute.xlu0 %119
  %123 = vset.pattern.permute.xlu0 0
  %124 = vperm.xlu0 %123, %v54
  %v125 = vpop.permute.xlu0 %124
  %128 = vset.pattern.permute.xlu0 0
  %129 = vperm.xlu0 %128, %v55
  %v130 = vpop.permute.xlu0 %129
  %133 = vset.pattern.permute.xlu0 0
  %134 = vperm.xlu0 %133, %v56
  %v135 = vpop.permute.xlu0 %134
  %vm137 = vcmask 261120
  %v139 = vsel %vm137, %v21, 0
  %v142 = vsel %vm137, %v22, 0
  %v145 = vsel %vm137, %v23, 0
  %v148 = vsel %vm137, %v24, 0
  %v151 = vsel %vm137, %v25, 0
  %v154 = vsel %vm137, %v26, 0
  %v157 = vsel %vm137, %v27, 0
  %v160 = vsel %vm137, %v28, 0
  %v163 = vsel %vm137, %v29, 0
  %v166 = vsel %vm137, %v30, 0
  %v169 = vsel %vm137, %v31, 0
  %v172 = vsel %vm137, %v32, 0
  %v175 = vsel %vm137, %v33, 0
  %v178 = vsel %vm137, %v34, 0
  %v181 = vsel %vm137, %v35, 0
  %v184 = vsel %vm137, %v36, 0
  %186 = vmatprep.subr.mxu0 0.0
  %187 = vmatpush1.msra.mxu0 0.0
  %188 = vmatprep.subr.mxu0 0.0
  %189 = vmatpush1.msra.mxu0 0.0
  %190 = vmatprep.subr.mxu0 0.0
  %191 = vmatpush1.msra.mxu0 0.0
  %192 = vmatprep.subr.mxu0 0.0
  %193 = vmatpush1.msra.mxu0 0.0
  %194 = vmatprep.subr.mxu0 0.0
  %195 = vmatpush1.msra.mxu0 0.0
  %196 = vmatprep.subr.mxu0 0.0
  %197 = vmatpush1.msra.mxu0 0.0
  %198 = vmatprep.subr.mxu0 0.0
  %199 = vmatpush1.msra.mxu0 0.0
  %200 = vmatprep.subr.mxu0 0.0
  %201 = vmatpush1.msra.mxu0 0.0
  %202 = vmatprep.subr.mxu0 0.0
  %203 = vmatpush1.msra.mxu0 0.0
  %204 = vmatprep.subr.mxu0 0.0
  %205 = vmatpush1.msra.mxu0 0.0
  %206 = vmatprep.subr.mxu0 0.0
  %207 = vmatpush1.msra.mxu0 0.0
  %208 = vmatprep.subr.mxu0 0.0
  %209 = vmatpush1.msra.mxu0 0.0
  %210 = vmatprep.subr.mxu0 0.0
  %211 = vmatpush1.msra.mxu0 %v20
  %212 = vmatprep.subr.mxu0 0.0
  %213 = vmatpush1.msra.mxu0 %v19
  %214 = vmatprep.subr.mxu0 0.0
  %215 = vmatpush1.msra.mxu0 %v18
  %216 = vmatprep.subr.mxu0 0.0
  %217 = vmatpush1.msra.mxu0 %v17
  %218 = vmatprep.subr.mxu0 0.0
  %219 = vmatpush2.msra.mxu0 0.0
  %220 = vmatprep.subr.mxu0 0.0
  %221 = vmatpush2.msra.mxu0 0.0
  %222 = vmatprep.subr.mxu0 0.0
  %223 = vmatpush2.msra.mxu0 0.0
  %224 = vmatprep.subr.mxu0 0.0
  %225 = vmatpush2.msra.mxu0 0.0
  %226 = vmatprep.subr.mxu0 0.0
  %227 = vmatpush2.msra.mxu0 0.0
  %228 = vmatprep.subr.mxu0 0.0
  %229 = vmatpush2.msra.mxu0 0.0
  %230 = vmatprep.subr.mxu0 0.0
  %231 = vmatpush2.msra.mxu0 0.0
  %232 = vmatprep.subr.mxu0 0.0
  %233 = vmatpush2.msra.mxu0 0.0
  %234 = vmatprep.subr.mxu0 0.0
  %235 = vmatpush2.msra.mxu0 0.0
  %236 = vmatprep.subr.mxu0 0.0
  %237 = vmatpush2.msra.mxu0 0.0
  %238 = vmatprep.subr.mxu0 0.0
  %239 = vmatpush2.msra.mxu0 0.0
  %240 = vmatprep.subr.mxu0 0.0
  %241 = vmatpush2.msra.mxu0 0.0
  %242 = vmatprep.subr.mxu0 0.0
  %243 = vmatpush2.msra.mxu0 0.0
  %244 = vmatprep.subr.mxu0 0.0
  %245 = vmatpush2.msra.mxu0 0.0
  %246 = vmatprep.subr.mxu0 0.0
  %247 = vmatpush2.msra.mxu0 0.0
  %248 = vmatprep.subr.mxu0 0.0
  %249 = vmatpush2.msra.mxu0 0.0
  %250 = vmatprep.mubr.f32.mxu0 0.0
  %251 = vmatmul.mubr.f32.gmra.mxu0 %v139
  %v252 = vpop.f32.mrf.mxu0
  %v253 = vadd.f32 %v60, %v252
  %v254 = vpop.f32.mrf.mxu0
  %255 = vmatprep.mubr.f32.mxu0 0.0
  %256 = vmatmul.mubr.f32.gmra.mxu0 %v142
  %v257 = vpop.f32.mrf.mxu0
  %v258 = vadd.f32 %v65, %v257
  %v259 = vpop.f32.mrf.mxu0
  %260 = vmatprep.mubr.f32.mxu0 0.0
  %261 = vmatmul.mubr.f32.gmra.mxu0 %v145
  %v262 = vpop.f32.mrf.mxu0
  %v263 = vadd.f32 %v70, %v262
  %v264 = vpop.f32.mrf.mxu0
  %265 = vmatprep.mubr.f32.mxu0 0.0
  %266 = vmatmul.mubr.f32.gmra.mxu0 %v148
  %v267 = vpop.f32.mrf.mxu0
  %v268 = vadd.f32 %v75, %v267
  %v269 = vpop.f32.mrf.mxu0
  %270 = vmatprep.mubr.f32.mxu0 0.0
  %271 = vmatmul.mubr.f32.gmra.mxu0 %v151
  %v272 = vpop.f32.mrf.mxu0
  %v273 = vadd.f32 %v80, %v272
  %v274 = vpop.f32.mrf.mxu0
  %275 = vmatprep.mubr.f32.mxu0 0.0
  %276 = vmatmul.mubr.f32.gmra.mxu0 %v154
  %v277 = vpop.f32.mrf.mxu0
  %v278 = vadd.f32 %v85, %v277
  %v279 = vpop.f32.mrf.mxu0
  %280 = vmatprep.mubr.f32.mxu0 0.0
  %281 = vmatmul.mubr.f32.gmra.mxu0 %v157
  %v282 = vpop.f32.mrf.mxu0
  %v283 = vadd.f32 %v90, %v282
  %v284 = vpop.f32.mrf.mxu0
  %285 = vmatprep.mubr.f32.mxu0 0.0
  %286 = vmatmul.mubr.f32.gmra.mxu0 %v160
  %v287 = vpop.f32.mrf.mxu0
  %v288 = vadd.f32 %v95, %v287
  %v289 = vpop.f32.mrf.mxu0
  %290 = vmatprep.mubr.f32.mxu0 0.0
  %291 = vmatmul.mubr.f32.gmra.mxu0 %v163
  %v292 = vpop.f32.mrf.mxu0
  %v293 = vadd.f32 %v100, %v292
  %v294 = vpop.f32.mrf.mxu0
  %295 = vmatprep.mubr.f32.mxu0 0.0
  %296 = vmatmul.mubr.f32.gmra.mxu0 %v166
  %v297 = vpop.f32.mrf.mxu0
  %v298 = vadd.f32 %v105, %v297
  %v299 = vpop.f32.mrf.mxu0
  %300 = vmatprep.mubr.f32.mxu0 0.0
  %301 = vmatmul.mubr.f32.gmra.mxu0 %v169
  %v302 = vpop.f32.mrf.mxu0
  %v303 = vadd.f32 %v110, %v302
  %v304 = vpop.f32.mrf.mxu0
  %305 = vmatprep.mubr.f32.mxu0 0.0
  %306 = vmatmul.mubr.f32.gmra.mxu0 %v172
  %v307 = vpop.f32.mrf.mxu0
  %v308 = vadd.f32 %v115, %v307
  %v309 = vpop.f32.mrf.mxu0
  %310 = vmatprep.mubr.f32.mxu0 0.0
  %311 = vmatmul.mubr.f32.gmra.mxu0 %v175
  %v312 = vpop.f32.mrf.mxu0
  %v313 = vadd.f32 %v120, %v312
  %v314 = vpop.f32.mrf.mxu0
  %315 = vmatprep.mubr.f32.mxu0 0.0
  %316 = vmatmul.mubr.f32.gmra.mxu0 %v178
  %v317 = vpop.f32.mrf.mxu0
  %v318 = vadd.f32 %v125, %v317
  %v319 = vpop.f32.mrf.mxu0
  %320 = vmatprep.mubr.f32.mxu0 0.0
  %321 = vmatmul.mubr.f32.gmra.mxu0 %v181
  %v322 = vpop.f32.mrf.mxu0
  %v323 = vadd.f32 %v130, %v322
  %v324 = vpop.f32.mrf.mxu0
  %325 = vmatprep.mubr.f32.mxu0 0.0
  %326 = vmatmul.mubr.f32.gmra.mxu0 %v184
  %v327 = vpop.f32.mrf.mxu0
  %v328 = vadd.f32 %v135, %v327
  %v329 = vpop.f32.mrf.mxu0
  %330 = vdwg.mxu0
  %vm331 = vcmp.ge.f32.partialorder %v253, 0.0
  %vm332 = vcmp.ge.f32.partialorder %v258, 0.0
  %vm333 = vcmp.ge.f32.partialorder %v263, 0.0
  %vm334 = vcmp.ge.f32.partialorder %v268, 0.0
  %vm335 = vcmp.ge.f32.partialorder %v273, 0.0
  %vm336 = vcmp.ge.f32.partialorder %v278, 0.0
  %vm337 = vcmp.ge.f32.partialorder %v283, 0.0
  %vm338 = vcmp.ge.f32.partialorder %v288, 0.0
  %vm339 = vcmp.ge.f32.partialorder %v293, 0.0
  %vm340 = vcmp.ge.f32.partialorder %v298, 0.0
  %vm341 = vcmp.ge.f32.partialorder %v303, 0.0
  %vm342 = vcmp.ge.f32.partialorder %v308, 0.0
  %vm343 = vcmp.ge.f32.partialorder %v313, 0.0
  %vm344 = vcmp.ge.f32.partialorder %v318, 0.0
  %vm345 = vcmp.ge.f32.partialorder %v323, 0.0
  %vm346 = vcmp.ge.f32.partialorder %v328, 0.0
  %v347 = vmul.f32 %v253, 0.01
  %v348 = vmul.f32 %v258, 0.01
  %v349 = vmul.f32 %v263, 0.01
  %v350 = vmul.f32 %v268, 0.01
  %v351 = vmul.f32 %v273, 0.01
  %v352 = vmul.f32 %v278, 0.01
  %v353 = vmul.f32 %v283, 0.01
  %v354 = vmul.f32 %v288, 0.01
  %v355 = vmul.f32 %v293, 0.01
  %v356 = vmul.f32 %v298, 0.01
  %v357 = vmul.f32 %v303, 0.01
  %v358 = vmul.f32 %v308, 0.01
  %v359 = vmul.f32 %v313, 0.01
  %v360 = vmul.f32 %v318, 0.01
  %v361 = vmul.f32 %v323, 0.01
  %v362 = vmul.f32 %v328, 0.01
  %v363 = vsel %vm331, %v253, %v347
  %v364 = vsel %vm332, %v258, %v348
  %v365 = vsel %vm333, %v263, %v349
  %v366 = vsel %vm334, %v268, %v350
  %v367 = vsel %vm335, %v273, %v351
  %v368 = vsel %vm336, %v278, %v352
  %v369 = vsel %vm337, %v283, %v353
  %v370 = vsel %vm338, %v288, %v354
  %v371 = vsel %vm339, %v293, %v355
  %v372 = vsel %vm340, %v298, %v356
  %v373 = vsel %vm341, %v303, %v357
  %v374 = vsel %vm342, %v308, %v358
  %v375 = vsel %vm343, %v313, %v359
  %v376 = vsel %vm344, %v318, %v360
  %v377 = vsel %vm345, %v323, %v361
  %v378 = vsel %vm346, %v328, %v362
  %379 = vmatprep.subr.mxu0 0.0
  %380 = vmatpush1.msra.mxu0 %v378
  %381 = vmatprep.subr.mxu0 0.0
  %382 = vmatpush1.msra.mxu0 %v377
  %383 = vmatprep.subr.mxu0 0.0
  %384 = vmatpush1.msra.mxu0 %v376
  %385 = vmatprep.subr.mxu0 0.0
  %386 = vmatpush1.msra.mxu0 %v375
  %387 = vmatprep.subr.mxu0 0.0
  %388 = vmatpush1.msra.mxu0 %v374
  %389 = vmatprep.subr.mxu0 0.0
  %390 = vmatpush1.msra.mxu0 %v373
  %391 = vmatprep.subr.mxu0 0.0
  %392 = vmatpush1.msra.mxu0 %v372
  %393 = vmatprep.subr.mxu0 0.0
  %394 = vmatpush1.msra.mxu0 %v371
  %395 = vmatprep.subr.mxu0 0.0
  %396 = vmatpush1.msra.mxu0 %v370
  %397 = vmatprep.subr.mxu0 0.0
  %398 = vmatpush1.msra.mxu0 %v369
  %399 = vmatprep.subr.mxu0 0.0
  %400 = vmatpush1.msra.mxu0 %v368
  %401 = vmatprep.subr.mxu0 0.0
  %402 = vmatpush1.msra.mxu0 %v367
  %403 = vmatprep.subr.mxu0 0.0
  %404 = vmatpush1.msra.mxu0 %v366
  %405 = vmatprep.subr.mxu0 0.0
  %406 = vmatpush1.msra.mxu0 %v365
  %407 = vmatprep.subr.mxu0 0.0
  %408 = vmatpush1.msra.mxu0 %v364
  %409 = vmatprep.subr.mxu0 0.0
  %410 = vmatpush1.msra.mxu0 %v363
  %411 = vmatprep.subr.mxu0 0.0
  %412 = vmatpush2.msra.mxu0 0.0
  %413 = vmatprep.subr.mxu0 0.0
  %414 = vmatpush2.msra.mxu0 0.0
  %415 = vmatprep.subr.mxu0 0.0
  %416 = vmatpush2.msra.mxu0 0.0
  %417 = vmatprep.subr.mxu0 0.0
  %418 = vmatpush2.msra.mxu0 0.0
  %419 = vmatprep.subr.mxu0 0.0
  %420 = vmatpush2.msra.mxu0 0.0
  %421 = vmatprep.subr.mxu0 0.0
  %422 = vmatpush2.msra.mxu0 0.0
  %423 = vmatprep.subr.mxu0 0.0
  %424 = vmatpush2.msra.mxu0 0.0
  %425 = vmatprep.subr.mxu0 0.0
  %426 = vmatpush2.msra.mxu0 0.0
  %427 = vmatprep.subr.mxu0 0.0
  %428 = vmatpush2.msra.mxu0 0.0
  %429 = vmatprep.subr.mxu0 0.0
  %430 = vmatpush2.msra.mxu0 0.0
  %431 = vmatprep.subr.mxu0 0.0
  %432 = vmatpush2.msra.mxu0 0.0
  %433 = vmatprep.subr.mxu0 0.0
  %434 = vmatpush2.msra.mxu0 0.0
  %435 = vmatprep.subr.mxu0 0.0
  %436 = vmatpush2.msra.mxu0 0.0
  %437 = vmatprep.subr.mxu0 0.0
  %438 = vmatpush2.msra.mxu0 0.0
  %439 = vmatprep.subr.mxu0 0.0
  %440 = vmatpush2.msra.mxu0 0.0
  %441 = vmatprep.subr.mxu0 0.0
  %442 = vmatpush2.msra.mxu0 0.0
  %443 = vmatprep.mubr.f32.mxu0 0.0
  %444 = vmatmul.mubr.f32.gmra.mxu0 %v37
  %v445 = vpop.f32.mrf.mxu0
  %v446 = vadd.f32 0.0, %v445
  %v447 = vpop.f32.mrf.mxu0
  %448 = vmatprep.mubr.f32.mxu0 0.0
  %449 = vmatmul.mubr.f32.gmra.mxu0 %v38
  %v450 = vpop.f32.mrf.mxu0
  %v451 = vadd.f32 0.0, %v450
  %v452 = vpop.f32.mrf.mxu0
  %453 = vmatprep.mubr.f32.mxu0 0.0
  %454 = vmatmul.mubr.f32.gmra.mxu0 %v39
  %v455 = vpop.f32.mrf.mxu0
  %v456 = vadd.f32 0.0, %v455
  %v457 = vpop.f32.mrf.mxu0
  %458 = vmatprep.mubr.f32.mxu0 0.0
  %459 = vmatmul.mubr.f32.gmra.mxu0 %v40
  %v460 = vpop.f32.mrf.mxu0
  %v461 = vadd.f32 0.0, %v460
  %v462 = vpop.f32.mrf.mxu0
  %463 = vdwg.mxu0
  %464 = vst [vmem:[%s4] sm:$0xff] %v446
  %465 = vst [vmem:[%s4 + $0x8] sm:$0xff] %v451
  %466 = vst [vmem:[%s4 + $0x10] sm:$0xff] %v456
  %467 = vst [vmem:[%s4 + $0x18] sm:$0xff] %v461
  // Predicated region
  $region18: #{feed_forward.1} parent=0 // pred_check
    _
  $region19: #{feed_forward.1} parent=0 // pred_check_branch
    %469 = sbr.rel (0) target = $region21
  $region20: #{feed_forward.1} parent=0 // pred_region
    _
  $region21: #{feed_forward.1} parent=0 // pred_fallthru
    _
  // Predicated region
  $region22: #{feed_forward.1} parent=0 // pred_check
    _
  $region23: #{feed_forward.1} parent=0 // pred_check_branch
    %471 = sbr.rel (0) target = $region25
  $region24: #{feed_forward.1} parent=0 // pred_region
    _
  $region25: #{feed_forward.1} parent=0 // pred_fallthru
    _

</llo_original>
